<compile_context>
chip_gen: v7x
topology: tpu7x:2x2x1
jax: 0.10.0
libtpu: 0.0.40
codegen_flags: <defaults>
</compile_context>

<pallas_src>
import jax
import jax.numpy as jnp
from jax.experimental import pallas as pl
from jax.experimental.pallas import tpu as pltpu

_LANE = 128
_TARGET_TILE_BYTES = 8 * 1024 * 1024    # ~8 MiB tiles (amortize per-step overhead)
_SMALL_INPUT_BYTES = 4 * 1024 * 1024    # <= 4 MiB -> single full-array block
_VMEM_LIMIT_BYTES = 40 * 1024 * 1024    # 2 in + 2 out 8 MiB bufs = 32 MiB < 40 MiB (v7x-safe)
_MIN_GRID_STEPS = 4                     # >= 2 steps per TensorCore on v7x megacore


def _identity_copy_kernel(x_ref, o_ref):
    # Pure elementwise pass-through of the current VMEM tile.
    o_ref[...] = x_ref[...]


def _sublane_rows(itemsize: int) -> int:
    """Rows per packed sublane group for this dtype width."""
    if itemsize >= 4:
        return 8
    if itemsize == 2:
        return 16
    return 32


def _choose_2d_view(total: int, itemsize: int):
    """Pick a lane-dense (rows, cols) view of the flat element stream (no padding)."""
    sub = _sublane_rows(itemsize)
    lane_widths = (8192, 4096, 2048, 1024, 512, 256, 128)
    # Best: a multiple-of-128 lane width that divides exactly and leaves full
    # sublane groups.
    for cols in lane_widths:
        if total % cols == 0 and total // cols >= sub:
            return total // cols, cols
    # Next best: any multiple-of-128 lane width that divides exactly.
    for cols in lane_widths:
        if total % cols == 0:
            return total // cols, cols
    # total is not a multiple of 128: use the largest divisor >= 128 as the lane
    # width (preferring one that keeps >= sub rows) so at most one vreg per row
    # is masked, instead of a narrow fully-masked layout.
    best_any = None
    best_sub = None
    d = 1
    while d * d <= total:
        if total % d == 0:
            for c in (d, total // d):
                if c >= _LANE:
                    if best_any is None or c > best_any:
                        best_any = c
                    if total // c >= sub and (best_sub is None or c > best_sub):
                        best_sub = c
        d += 1
    cols = best_sub if best_sub is not None else best_any
    if cols is not None:
        return total // cols, cols
    # Pathological (tiny / prime totals): one full-extent row.
    return 1, total


def _choose_blocks(rows: int, cols: int, itemsize: int):
    """Pick (block_rows, block_cols) targeting ~8 MiB tiles and >= 4 grid steps."""
    sub = _sublane_rows(itemsize)
    total_bytes = rows * cols * itemsize
    if total_bytes <= _SMALL_INPUT_BYTES:
        return rows, cols                       # single full-array block, grid=(1, 1)

    # Prefer blocking along rows: every block stays lane-dense / unmasked.
    row_bytes = max(1, cols * itemsize)
    br = _TARGET_TILE_BYTES // row_bytes
    br = max(sub, (br // sub) * sub)
    br = min(br, rows)
    if rows >= _MIN_GRID_STEPS * sub:
        # Guarantee >= _MIN_GRID_STEPS steps so both v7x cores double-buffer.
        cap = max(sub, ((rows // _MIN_GRID_STEPS) // sub) * sub)
        br = min(br, cap)
    block_rows = max(1, br)
    block_cols = cols

    # If rows alone cannot be split far enough (few, very long rows), block the
    # lane axis too, in multiples of 128.
    if block_rows * block_cols * itemsize > _TARGET_TILE_BYTES:
        bc = _TARGET_TILE_BYTES // max(1, block_rows * itemsize)
        bc = max(_LANE, (bc // _LANE) * _LANE)
        block_cols = min(bc, cols)

    return block_rows, block_cols


def fmri_decoder_z_forward(x: jax.Array, *, donate: bool = False) -> jax.Array:
    """Identity forward pass of fMRIDecoder_Z.

    donate=True means the caller allows the input buffer to back the output;
    since the op is a pure identity, no device pass is needed at all.
    """
    if donate:
        return x
    if x.size == 0:
        return x

    orig_shape = x.shape
    total = int(x.size)
    itemsize = x.dtype.itemsize

    rows, cols = _choose_2d_view(total, itemsize)
    x2 = x.reshape(rows, cols)                  # metadata-only row-major reshape

    block_rows, block_cols = _choose_blocks(rows, cols, itemsize)
    grid = (pl.cdiv(rows, block_rows), pl.cdiv(cols, block_cols))

    out2 = pl.pallas_call(
        _identity_copy_kernel,
        out_shape=jax.ShapeDtypeStruct((rows, cols), x2.dtype),
        grid_spec=pltpu.PrefetchScalarGridSpec(
            num_scalar_prefetch=0,
            grid=grid,
            in_specs=[pl.BlockSpec((block_rows, block_cols), lambda i, j: (i, j))],
            out_specs=pl.BlockSpec((block_rows, block_cols), lambda i, j: (i, j)),
        ),
        compiler_params=pltpu.CompilerParams(
            dimension_semantics=("parallel", "parallel"),
            vmem_limit_bytes=_VMEM_LIMIT_BYTES,
        ),
        cost_estimate=pl.CostEstimate(
            flops=0,
            transcendentals=0,
            bytes_accessed=2 * total * itemsize,
        ),
    )(x2)

    return out2.reshape(orig_shape)


if __name__ == "__main__":
    key = jax.random.PRNGKey(0)

    # Small NCHW input consistent with an fMRI-decoder-style module.
    x = jax.random.normal(key, (2, 4, 16, 16), dtype=jnp.float32)
    y = jax.block_until_ready(fmri_decoder_z_forward(x))
    assert y.shape == x.shape
    assert y.dtype == x.dtype
    assert bool(jnp.all(y == x))

    # Donated path: no device work, buffer reused directly.
    y_don = fmri_decoder_z_forward(x, donate=True)
    assert y_don is x

    # Multi-block lane-dense path (8 MiB -> several grid steps, megacore-splittable).
    x_big = jax.random.normal(jax.random.PRNGKey(1), (8, 4, 256, 256), jnp.float32)
    y_big = jax.block_until_ready(fmri_decoder_z_forward(x_big))
    assert bool(jnp.all(y_big == x_big))

    # Non-128-multiple total: largest-divisor lane width (wide, mostly unmasked).
    x_odd = jax.random.normal(jax.random.PRNGKey(2), (3, 5, 17, 13), jnp.float32)
    y_odd = jax.block_until_ready(fmri_decoder_z_forward(x_odd))
    assert bool(jnp.all(y_odd == x_odd))

    # Narrow dtype path (dtype-dependent sublane rounding).
    x_bf = jax.random.normal(jax.random.PRNGKey(3), (4, 16, 32, 64), jnp.bfloat16)
    y_bf = jax.block_until_ready(fmri_decoder_z_forward(x_bf))
    assert bool(jnp.all(y_bf == x_bf))

    print("KERNEL_OK")
</pallas_src>

<mosaic_0001>
module attributes {stable_mosaic.version = 11 : i64} {
  func.func @_identity_copy_kernel(%arg0: i32, %arg1: i32, %arg2: memref<8x256xf32, #tpu.memory_space<vmem>>, %arg3: memref<8x256xf32, #tpu.memory_space<vmem>>) attributes {dimension_semantics = [#tpu.dimension_semantics<parallel>, #tpu.dimension_semantics<parallel>], iteration_bounds = array<i64: 1, 1>, scalar_prefetch = 0 : i64, scratch_operands = 0 : i64, tpu.core_type = #tpu.core_type<tc>, window_params = [{transform_indices = @transform_0, window_bounds = array<i64: 8, 256>}, {transform_indices = @transform_1, window_bounds = array<i64: 8, 256>}]} {
    %c0 = arith.constant 0 : index
    %c0_0 = arith.constant 0 : index
    %0 = vector.load %arg2[%c0, %c0_0] : memref<8x256xf32, #tpu.memory_space<vmem>>, vector<8x256xf32>
    %c0_1 = arith.constant 0 : index
    %c0_2 = arith.constant 0 : index
    %1 = vector.load %arg3[%c0_1, %c0_2] : memref<8x256xf32, #tpu.memory_space<vmem>>, vector<8x256xf32>
    tpu.vector_store %arg3[%c0_1, %c0_2], %0 {strides = array<i32>} : memref<8x256xf32, #tpu.memory_space<vmem>>, vector<8x256xf32>,
    return
  }
  func.func @transform_0(%arg0: i32, %arg1: i32) -> (i32, i32) {
    %c0_i32 = arith.constant 0 : i32
    return %arg0, %arg1 : i32, i32
  }
  func.func @transform_1(%arg0: i32, %arg1: i32) -> (i32, i32) {
    %c0_i32 = arith.constant 0 : i32
    return %arg0, %arg1 : i32, i32
  }
}

</mosaic_0001>

<llo_original>
// kernel: tpu_custom_call.1
$region0: #{tpu_custom_call.1}
  #allocation0 [shape = 'u32[]', space=smem, size = 0x4, offset = 0x4, fixed_abs, tag = 'smem constant byte address 0x4 - core index']
  #allocation1 [shape = 'u32[144,128]{1,0:T(1,128)}', space=vmem, size = 0x12000, scoped, tag = 'internal scratch']
  %s0 = inlined_call_operand.hbm [shape: f32[8,256], index: 0, kind: input, shape index: {}]
  %s1 = inlined_call_operand.hbm [shape: f32[8,256], index: 1, kind: output, shape index: {}]
  %s2 = sld [smem:[#allocation0]]
  $region18: #{tpu_custom_call.1} parent=0
    _
  %s4 = ssub.s32 1, %s2
  %s5 = scalar_select 0, %s4, %s2
  $region1: #{tpu_custom_call.1} parent=0
    #allocation2 [shape = 'u8[8192]{0}', space=vmem, size = 0x2000, scoped, tag = 'input window, operand 0, single buffered']
    #allocation3 [shape = 's32[1]{0}', space=sflag, size = 0x4, scoped, tag = 'scoped memory for tpu_custom_call.1']
    #allocation4 [shape = 's32[1]{0}', space=sflag, size = 0x4, scoped, tag = 'scoped memory for tpu_custom_call.1']
    #allocation5 [shape = 'u8[8192]{0}', space=vmem, size = 0x2000, scoped, tag = 'output window, operand 0, single buffered']
    %6 = vsyncpa [#allocation3], 0
    %7 = vsyncpa [#allocation4], 0
    // Predicated region
    $region2: #{tpu_custom_call.1} parent=1 // pred_check
      _
    $region3: #{tpu_custom_call.1} parent=1 // pred_check_branch
      %9 = sbr.rel (0) target = $region5
    $region4: #{tpu_custom_call.1} parent=1 // pred_region
      %s11 = ssub.s32 256, 256
      %12 = vsyncadd [#allocation3], %s11
      %s14 = sshll.u32 [#allocation2], 4
      %s15 = int_to_ptr.vmem [resolvable:$true] %s14
      %17 = dma.hbm_to_vmem [thread:$0]  %s0, 256, %s15, [#allocation3]
    $region5: #{tpu_custom_call.1} parent=1 // pred_fallthru
      _
    // Predicated region
    $region6: #{tpu_custom_call.1} parent=1 // pred_check
      _
    $region7: #{tpu_custom_call.1} parent=1 // pred_check_branch
      %19 = sbr.rel (0) target = $region9
    $region8: #{tpu_custom_call.1} parent=1 // pred_region
      %20 = dma.done [#allocation3], 256
    $region9: #{tpu_custom_call.1} parent=1 // pred_fallthru
      _
    %v21 = vld [vmem:[#allocation2] sm:$0xff]
    %v22 = vld [vmem:[#allocation2 + $0x8] sm:$0xff]
    %23 = vst [vmem:[#allocation5] sm:$0xff] %v21
    %24 = vst [vmem:[#allocation5 + $0x8] sm:$0xff] %v22
    // Predicated region
    $region10: #{tpu_custom_call.1} parent=1 // pred_check
      _
    $region11: #{tpu_custom_call.1} parent=1 // pred_check_branch
      %26 = sbr.rel (0) target = $region13
    $region12: #{tpu_custom_call.1} parent=1 // pred_region
      %s28 = ssub.s32 256, 256
      %29 = vsyncadd [#allocation4], %s28
      %s31 = sshll.u32 [#allocation5], 4
      %s32 = int_to_ptr.vmem [resolvable:$true] %s31
      %34 = dma.vmem_to_hbm [thread:$0]  %s32, 256, %s1, [#allocation4]
    $region13: #{tpu_custom_call.1} parent=1 // pred_fallthru
      _
    // Predicated region
    $region14: #{tpu_custom_call.1} parent=1 // pred_check
      _
    $region15: #{tpu_custom_call.1} parent=1 // pred_check_branch
      %36 = sbr.rel (0) target = $region17
    $region16: #{tpu_custom_call.1} parent=1 // pred_region
      %37 = dma.done [#allocation4], 256
    $region17: #{tpu_custom_call.1} parent=1 // pred_fallthru
      _
    %38 = vsyncpa [#allocation3], 1
    %39 = vsyncpa [#allocation4], 1

</llo_original>
